<compile_context>
chip_gen: v5e
topology: v5e:2x2
jax: 0.10.0
libtpu: 0.0.40
codegen_flags: <defaults>
</compile_context>

<pallas_src>
import jax
import jax.numpy as jnp
from jax.experimental import pallas as pl
from jax.experimental.pallas import tpu as pltpu


def decoder_kernel(z_ref, w1_ref, b1_ref, w2_ref, b2_ref, w3_ref, b3_ref, o_ref):
    # fc1 (bf16 x bf16 -> f32 acc) + bias + ReLU in f32
    h1 = jnp.dot(z_ref[...], w1_ref[...], preferred_element_type=jnp.float32)
    h1 = jnp.maximum(h1 + b1_ref[...], 0.0)
    # fc2
    h2 = jnp.dot(h1.astype(jnp.bfloat16), w2_ref[...],
                 preferred_element_type=jnp.float32)
    h2 = jnp.maximum(h2 + b2_ref[...], 0.0)
    # fc3 + sigmoid: exp on the EUP, approx reciprocal also on the EUP
    # (avoids the full-precision VALU divide chain; VALU stays free as writeback drains)
    y = jnp.dot(h2.astype(jnp.bfloat16), w3_ref[...],
                preferred_element_type=jnp.float32)
    sig = pl.reciprocal(1.0 + jnp.exp(-(y + b3_ref[...])), approx=True)
    o_ref[...] = sig.astype(o_ref.dtype)   # bf16 output store


def _round_up(x, m):
    return ((x + m - 1) // m) * m


def decoder_forward(z, w1, b1, w2, b2, w3, b3, *, tile_b=None):
    """z: (B, z_dim) f32; weights pre-transposed to (in, out); biases (1, out).

    Returns bf16 output of shape (B, out_dim). Upcast outside if f32 is required.
    """
    B, z_dim = z.shape
    out_dim = w3.shape[1]

    # --- bf16 operands for the MXU; biases stay f32 for the elementwise path ---
    z_bf = z.astype(jnp.bfloat16)
    w1 = w1.astype(jnp.bfloat16)
    w2 = w2.astype(jnp.bfloat16)
    w3 = w3.astype(jnp.bfloat16)
    b1 = b1.astype(jnp.float32)
    b2 = b2.astype(jnp.float32)
    b3 = b3.astype(jnp.float32)

    # --- batch tiling ---
    #  * multiples of 16 (bf16 packs (16,128) per vreg)
    #  * large tiles (<=2048) to amortize ~0.35 us per grid step
    #  * for B > 16: at least 2 tiles so the "parallel" axis shards across v7x's 2 TCs
    if tile_b is None:
        if B <= 16:
            tile_b = 16
        else:
            tile_b = min(2048, _round_up(pl.cdiv(B, 2), 16))
    b_pad = pl.cdiv(B, tile_b) * tile_b
    if b_pad != B:
        z_bf = jnp.pad(z_bf, ((0, b_pad - B), (0, 0)))
    n_tiles = b_pad // tile_b

    grid_spec = pltpu.PrefetchScalarGridSpec(
        num_scalar_prefetch=0,
        grid=(n_tiles,),
        in_specs=[
            pl.BlockSpec((tile_b, z_dim), lambda i: (i, 0)),   # batch-tiled activations
            pl.BlockSpec(w1.shape, lambda i: (0, 0)),          # weights/biases resident
            pl.BlockSpec(b1.shape, lambda i: (0, 0)),
            pl.BlockSpec(w2.shape, lambda i: (0, 0)),
            pl.BlockSpec(b2.shape, lambda i: (0, 0)),
            pl.BlockSpec(w3.shape, lambda i: (0, 0)),
            pl.BlockSpec(b3.shape, lambda i: (0, 0)),
        ],
        # last dim 784 == full array extent -> legal block; no column padding/slicing.
        out_specs=pl.BlockSpec((tile_b, out_dim), lambda i: (i, 0)),
    )

    out = pl.pallas_call(
        decoder_kernel,
        out_shape=jax.ShapeDtypeStruct((b_pad, out_dim), jnp.bfloat16),
        grid_spec=grid_spec,
        compiler_params=pltpu.CompilerParams(
            dimension_semantics=("parallel",),   # megacore sharding on v7x
            vmem_limit_bytes=32 << 20,           # needed on v5e (16 MiB default scoped)
        ),
    )(z_bf, w1, b1, w2, b2, w3, b3)

    # Row slice only when batch was padded (no full-output column re-pack pass).
    if b_pad != B:
        out = out[:B]
    return out


def init_params(key, z_dim, hidden_1, hidden_2, out_dim=784):
    """Deterministic synthetic params (PyTorch nn.Linear shapes, stored transposed)."""
    k = jax.random.split(key, 6)
    # nn.Linear weight is (out, in); we store (in, out) so the kernel does x @ W.
    w1 = jax.random.normal(k[0], (z_dim, hidden_1), jnp.float32) * 0.1
    b1 = jax.random.normal(k[1], (1, hidden_1), jnp.float32) * 0.1
    w2 = jax.random.normal(k[2], (hidden_1, hidden_2), jnp.float32) * 0.1
    b2 = jax.random.normal(k[3], (1, hidden_2), jnp.float32) * 0.1
    w3 = jax.random.normal(k[4], (hidden_2, out_dim), jnp.float32) * 0.1
    b3 = jax.random.normal(k[5], (1, out_dim), jnp.float32) * 0.1
    return w1, b1, w2, b2, w3, b3


def reference_forward(z, w1, b1, w2, b2, w3, b3):
    h1 = jnp.maximum(z @ w1 + b1, 0.0)
    h2 = jnp.maximum(h1 @ w2 + b2, 0.0)
    return jax.nn.sigmoid(h2 @ w3 + b3)


if __name__ == "__main__":
    B, z_dim, hidden_1, hidden_2 = 8, 16, 32, 64

    key = jax.random.PRNGKey(0)
    kz, kp = jax.random.split(key)
    z = jax.random.normal(kz, (B, z_dim), jnp.float32)
    params = init_params(kp, z_dim, hidden_1, hidden_2)

    out = decoder_forward(z, *params)
    out = jax.block_until_ready(out)

    ref = reference_forward(z, *params)  # f32 module reference
    assert out.shape == (B, 784)
    assert out.dtype == jnp.bfloat16
    # bf16 weights/activations/output with f32 accumulation -> small deviation from f32 ref
    err = jnp.max(jnp.abs(out.astype(jnp.float32) - ref))
    assert err < 3e-2, f"max abs error {err}"

    print("KERNEL_OK")
</pallas_src>

<mosaic_0001>
module attributes {stable_mosaic.version = 11 : i64} {
  func.func @decoder_kernel(%arg0: i32, %arg1: memref<16x16xbf16, #tpu.memory_space<vmem>>, %arg2: memref<16x32xbf16, #tpu.memory_space<vmem>>, %arg3: memref<1x32xf32, #tpu.memory_space<vmem>>, %arg4: memref<32x64xbf16, #tpu.memory_space<vmem>>, %arg5: memref<1x64xf32, #tpu.memory_space<vmem>>, %arg6: memref<64x784xbf16, #tpu.memory_space<vmem>>, %arg7: memref<1x784xf32, #tpu.memory_space<vmem>>, %arg8: memref<16x784xbf16, #tpu.memory_space<vmem>>) attributes {dimension_semantics = [#tpu.dimension_semantics<parallel>], iteration_bounds = array<i64: 1>, scalar_prefetch = 0 : i64, scratch_operands = 0 : i64, tpu.core_type = #tpu.core_type<tc>, window_params = [{transform_indices = @transform_0, window_bounds = array<i64: 16, 16>}, {pipeline_mode = #tpu.pipeline_mode<synchronous>, transform_indices = @transform_1, window_bounds = array<i64: 16, 32>}, {pipeline_mode = #tpu.pipeline_mode<synchronous>, transform_indices = @transform_2, window_bounds = array<i64: 1, 32>}, {pipeline_mode = #tpu.pipeline_mode<synchronous>, transform_indices = @transform_3, window_bounds = array<i64: 32, 64>}, {pipeline_mode = #tpu.pipeline_mode<synchronous>, transform_indices = @transform_4, window_bounds = array<i64: 1, 64>}, {pipeline_mode = #tpu.pipeline_mode<synchronous>, transform_indices = @transform_5, window_bounds = array<i64: 64, 784>}, {pipeline_mode = #tpu.pipeline_mode<synchronous>, transform_indices = @transform_6, window_bounds = array<i64: 1, 784>}, {transform_indices = @transform_7, window_bounds = array<i64: 16, 784>}]} {
    %c0 = arith.constant 0 : index
    %c0_0 = arith.constant 0 : index
    %0 = vector.load %arg1[%c0, %c0_0] : memref<16x16xbf16, #tpu.memory_space<vmem>>, vector<16x16xbf16>
    %c0_1 = arith.constant 0 : index
    %c0_2 = arith.constant 0 : index
    %1 = vector.load %arg2[%c0_1, %c0_2] : memref<16x32xbf16, #tpu.memory_space<vmem>>, vector<16x32xbf16>
    %cst = arith.constant dense<0.000000e+00> : vector<16x32xf32>
    %2 = tpu.matmul %0, %1, %cst {dimension_numbers = #tpu.dot_dimension_numbers<[1], [0], [0], [1], [0, 0, 1, 1], [], []>} : vector<16x16xbf16>, vector<16x32xbf16>, vector<16x32xf32> -> vector<16x32xf32>
    %c0_3 = arith.constant 0 : index
    %c0_4 = arith.constant 0 : index
    %3 = vector.load %arg3[%c0_3, %c0_4] : memref<1x32xf32, #tpu.memory_space<vmem>>, vector<1x32xf32>
    %4 = vector.broadcast %3 : vector<1x32xf32> to vector<16x32xf32>
    %5 = arith.addf %2, %4 : vector<16x32xf32>
    %cst_5 = arith.constant 0.000000e+00 : f32
    %6 = vector.broadcast %cst_5 : f32 to vector<16x32xf32>
    %7 = arith.maximumf %5, %6 : vector<16x32xf32>
    %8 = arith.truncf %7 : vector<16x32xf32> to vector<16x32xbf16>
    %c0_6 = arith.constant 0 : index
    %c0_7 = arith.constant 0 : index
    %9 = vector.load %arg4[%c0_6, %c0_7] : memref<32x64xbf16, #tpu.memory_space<vmem>>, vector<32x64xbf16>
    %cst_8 = arith.constant dense<0.000000e+00> : vector<16x64xf32>
    %10 = tpu.matmul %8, %9, %cst_8 {dimension_numbers = #tpu.dot_dimension_numbers<[1], [0], [0], [1], [0, 0, 1, 1], [], []>} : vector<16x32xbf16>, vector<32x64xbf16>, vector<16x64xf32> -> vector<16x64xf32>
    %c0_9 = arith.constant 0 : index
    %c0_10 = arith.constant 0 : index
    %11 = vector.load %arg5[%c0_9, %c0_10] : memref<1x64xf32, #tpu.memory_space<vmem>>, vector<1x64xf32>
    %12 = vector.broadcast %11 : vector<1x64xf32> to vector<16x64xf32>
    %13 = arith.addf %10, %12 : vector<16x64xf32>
    %cst_11 = arith.constant 0.000000e+00 : f32
    %14 = vector.broadcast %cst_11 : f32 to vector<16x64xf32>
    %15 = arith.maximumf %13, %14 : vector<16x64xf32>
    %16 = arith.truncf %15 : vector<16x64xf32> to vector<16x64xbf16>
    %c0_12 = arith.constant 0 : index
    %c0_13 = arith.constant 0 : index
    %17 = vector.load %arg6[%c0_12, %c0_13] : memref<64x784xbf16, #tpu.memory_space<vmem>>, vector<64x784xbf16>
    %cst_14 = arith.constant dense<0.000000e+00> : vector<16x784xf32>
    %18 = tpu.matmul %16, %17, %cst_14 {dimension_numbers = #tpu.dot_dimension_numbers<[1], [0], [0], [1], [0, 0, 1, 1], [], []>} : vector<16x64xbf16>, vector<64x784xbf16>, vector<16x784xf32> -> vector<16x784xf32>
    %c0_15 = arith.constant 0 : index
    %c0_16 = arith.constant 0 : index
    %19 = vector.load %arg7[%c0_15, %c0_16] : memref<1x784xf32, #tpu.memory_space<vmem>>, vector<1x784xf32>
    %20 = vector.broadcast %19 : vector<1x784xf32> to vector<16x784xf32>
    %21 = arith.addf %18, %20 : vector<16x784xf32>
    %cst_17 = arith.constant 0.000000e+00 : f32
    %22 = vector.broadcast %cst_17 : f32 to vector<16x784xf32>
    %23 = arith.subf %22, %21 : vector<16x784xf32>
    %24 = math.exp %23 : vector<16x784xf32>
    %cst_18 = arith.constant 1.000000e+00 : f32
    %25 = vector.broadcast %cst_18 : f32 to vector<16x784xf32>
    %26 = arith.addf %25, %24 : vector<16x784xf32>
    %27 = tpu.reciprocal %26 {approx = true} : vector<16x784xf32> -> vector<16x784xf32>
    %28 = arith.truncf %27 : vector<16x784xf32> to vector<16x784xbf16>
    %c0_19 = arith.constant 0 : index
    %c0_20 = arith.constant 0 : index
    %29 = vector.load %arg8[%c0_19, %c0_20] : memref<16x784xbf16, #tpu.memory_space<vmem>>, vector<16x784xbf16>
    tpu.vector_store %arg8[%c0_19, %c0_20], %28 {strides = array<i32>} : memref<16x784xbf16, #tpu.memory_space<vmem>>, vector<16x784xbf16>,
    return
  }
  func.func @transform_0(%arg0: i32) -> (i32, i32) {
    %c0_i32 = arith.constant 0 : i32
    %c0_i32_0 = arith.constant 0 : i32
    return %arg0, %c0_i32 : i32, i32
  }
  func.func @transform_1(%arg0: i32) -> (i32, i32) {
    %c0_i32 = arith.constant 0 : i32
    %c0_i32_0 = arith.constant 0 : i32
    %c0_i32_1 = arith.constant 0 : i32
    return %c0_i32, %c0_i32_0 : i32, i32
  }
  func.func @transform_2(%arg0: i32) -> (i32, i32) {
    %c0_i32 = arith.constant 0 : i32
    %c0_i32_0 = arith.constant 0 : i32
    %c0_i32_1 = arith.constant 0 : i32
    return %c0_i32, %c0_i32_0 : i32, i32
  }
  func.func @transform_3(%arg0: i32) -> (i32, i32) {
    %c0_i32 = arith.constant 0 : i32
    %c0_i32_0 = arith.constant 0 : i32
    %c0_i32_1 = arith.constant 0 : i32
    return %c0_i32, %c0_i32_0 : i32, i32
  }
  func.func @transform_4(%arg0: i32) -> (i32, i32) {
    %c0_i32 = arith.constant 0 : i32
    %c0_i32_0 = arith.constant 0 : i32
    %c0_i32_1 = arith.constant 0 : i32
    return %c0_i32, %c0_i32_0 : i32, i32
  }
  func.func @transform_5(%arg0: i32) -> (i32, i32) {
    %c0_i32 = arith.constant 0 : i32
    %c0_i32_0 = arith.constant 0 : i32
    %c0_i32_1 = arith.constant 0 : i32
    return %c0_i32, %c0_i32_0 : i32, i32
  }
  func.func @transform_6(%arg0: i32) -> (i32, i32) {
    %c0_i32 = arith.constant 0 : i32
    %c0_i32_0 = arith.constant 0 : i32
    %c0_i32_1 = arith.constant 0 : i32
    return %c0_i32, %c0_i32_0 : i32, i32
  }
  func.func @transform_7(%arg0: i32) -> (i32, i32) {
    %c0_i32 = arith.constant 0 : i32
    %c0_i32_0 = arith.constant 0 : i32
    return %arg0, %c0_i32 : i32, i32
  }
}

</mosaic_0001>

<llo_original>
// kernel: tpu_custom_call.1
$region0: #{tpu_custom_call.1}
  #allocation0 [shape = 'u32[]', space=smem, size = 0x4, offset = 0x4, fixed_abs, tag = 'smem constant byte address 0x4 - core index']
  #allocation1 [shape = 'u32[72,128]{1,0:T(1,128)}', space=vmem, size = 0x9000, scoped, tag = 'internal scratch']
  %s0 = inlined_call_operand.hbm [shape: bf16[16,16], index: 0, kind: input, shape index: {}]
  %s1 = inlined_call_operand.hbm [shape: bf16[16,32], index: 1, kind: input, shape index: {}]
  %s2 = inlined_call_operand.vmem [shape: f32[1,32], index: 2, kind: input, shape index: {}]
  %s3 = inlined_call_operand.hbm [shape: bf16[32,64], index: 3, kind: input, shape index: {}]
  %s4 = inlined_call_operand.vmem [shape: f32[1,64], index: 4, kind: input, shape index: {}]
  %s5 = inlined_call_operand.hbm [shape: bf16[64,784], index: 5, kind: input, shape index: {}]
  %s6 = inlined_call_operand.hbm [shape: f32[1,784], index: 6, kind: input, shape index: {}]
  %s7 = inlined_call_operand.hbm [shape: bf16[16,784], index: 7, kind: output, shape index: {}]
  %s8 = sld [smem:[#allocation0]]
  $region58: #{tpu_custom_call.1} parent=0
    _
  %s10 = ssub.s32 1, %s8
  %s11 = scalar_select 0, %s10, %s8
  $region1: #{tpu_custom_call.1} parent=0
    #allocation2 [shape = 'u8[4096]{0}', space=vmem, size = 0x1000, scoped, tag = 'input window, operand 0, single buffered']
    #allocation3 [shape = 's32[1]{0}', space=sflag, size = 0x4, scoped, tag = 'scoped memory for tpu_custom_call.1']
    #allocation4 [shape = 's32[1]{0}', space=sflag, size = 0x4, scoped, tag = 'scoped memory for tpu_custom_call.1']
    #allocation5 [shape = 'u8[4096]{0}', space=vmem, size = 0x1000, scoped, tag = 'input window, operand 1, single buffered']
    #allocation6 [shape = 's32[1]{0}', space=sflag, size = 0x4, scoped, tag = 'scoped memory for tpu_custom_call.1']
    #allocation7 [shape = 'u8[8192]{0}', space=vmem, size = 0x2000, scoped, tag = 'input window, operand 3, single buffered']
    #allocation8 [shape = 'u8[114688]{0}', space=vmem, size = 0x1c000, scoped, tag = 'input window, operand 5, single buffered']
    #allocation9 [shape = 's32[1]{0}', space=sflag, size = 0x4, scoped, tag = 'scoped memory for tpu_custom_call.1']
    #allocation10 [shape = 'u8[3584]{0}', space=vmem, size = 0x1000, scoped, tag = 'input window, operand 6, single buffered']
    #allocation11 [shape = 'u8[28672]{0}', space=vmem, size = 0x7000, scoped, tag = 'output window, operand 0, single buffered']
    %12 = vsyncpa [#allocation3], 0
    %13 = vsyncpa [#allocation6], 0
    %14 = vsyncpa [#allocation9], 0
    %15 = vsyncpa [#allocation4], 0
    // Predicated region
    $region2: #{tpu_custom_call.1} parent=1 // pred_check
      _
    $region3: #{tpu_custom_call.1} parent=1 // pred_check_branch
      %17 = sbr.rel (0) target = $region5
    $region4: #{tpu_custom_call.1} parent=1 // pred_region
      %19 = vsyncadd [#allocation3], 0
      %s20 = sshll.u32 %s0, 4
      %s21 = int_to_ptr.hbm [resolvable:$true] %s20
      %s22 = sshll.u32 [#allocation2], 4
      %s23 = int_to_ptr.vmem [resolvable:$true] %s22
      %28 = dma.hbm_to_vmem [thread:$0]  %s21, 128, %s23, [#allocation3], 64, 64, 4
    $region5: #{tpu_custom_call.1} parent=1 // pred_fallthru
      _
    // Predicated region
    $region6: #{tpu_custom_call.1} parent=1 // pred_check
      _
    $region7: #{tpu_custom_call.1} parent=1 // pred_check_branch
      %30 = sbr.rel (0) target = $region9
    $region8: #{tpu_custom_call.1} parent=1 // pred_region
      %32 = vsyncadd [#allocation6], 0
      %s33 = sshll.u32 %s1, 4
      %s34 = int_to_ptr.hbm [resolvable:$true] %s33
      %s35 = sshll.u32 [#allocation5], 4
      %s36 = int_to_ptr.vmem [resolvable:$true] %s35
      %41 = dma.hbm_to_vmem [thread:$0]  %s34, 128, %s36, [#allocation6], 64, 64, 4
    $region9: #{tpu_custom_call.1} parent=1 // pred_fallthru
      _
    // Predicated region
    $region10: #{tpu_custom_call.1} parent=1 // pred_check
      _
    $region11: #{tpu_custom_call.1} parent=1 // pred_check_branch
      %43 = sbr.rel (0) target = $region13
    $region12: #{tpu_custom_call.1} parent=1 // pred_region
      _
    $region13: #{tpu_custom_call.1} parent=1 // pred_fallthru
      _
    // Predicated region
    $region14: #{tpu_custom_call.1} parent=1 // pred_check
      _
    $region15: #{tpu_custom_call.1} parent=1 // pred_check_branch
      %45 = sbr.rel (0) target = $region17
    $region16: #{tpu_custom_call.1} parent=1 // pred_region
      %47 = vsyncadd [#allocation6], 0
      %s48 = sshll.u32 %s3, 4
      %s49 = int_to_ptr.hbm [resolvable:$true] %s48
      %s50 = sshll.u32 [#allocation7], 4
      %s51 = int_to_ptr.vmem [resolvable:$true] %s50
      %56 = dma.hbm_to_vmem [thread:$0]  %s49, 256, %s51, [#allocation6], 64, 64, 4
    $region17: #{tpu_custom_call.1} parent=1 // pred_fallthru
      _
    // Predicated region
    $region18: #{tpu_custom_call.1} parent=1 // pred_check
      _
    $region19: #{tpu_custom_call.1} parent=1 // pred_check_branch
      %58 = sbr.rel (0) target = $region21
    $region20: #{tpu_custom_call.1} parent=1 // pred_region
      _
    $region21: #{tpu_custom_call.1} parent=1 // pred_fallthru
      _
    // Predicated region
    $region22: #{tpu_custom_call.1} parent=1 // pred_check
      _
    $region23: #{tpu_custom_call.1} parent=1 // pred_check_branch
      %60 = sbr.rel (0) target = $region25
    $region24: #{tpu_custom_call.1} parent=1 // pred_region
      %62 = vsyncadd [#allocation9], 0
      %s63 = sshll.u32 %s5, 4
      %s64 = int_to_ptr.hbm [resolvable:$true] %s63
      %s65 = sshll.u32 [#allocation8], 4
      %s66 = int_to_ptr.vmem [resolvable:$true] %s65
      %71 = dma.hbm_to_vmem [thread:$0]  %s64, 3584, %s66, [#allocation9], 448, 448, 28
    $region25: #{tpu_custom_call.1} parent=1 // pred_fallthru
      _
    // Predicated region
    $region26: #{tpu_custom_call.1} parent=1 // pred_check
      _
    $region27: #{tpu_custom_call.1} parent=1 // pred_check_branch
      %73 = sbr.rel (0) target = $region29
    $region28: #{tpu_custom_call.1} parent=1 // pred_region
      %75 = vsyncadd [#allocation9], 0
      %s77 = sshll.u32 %s6, 4
      %s78 = int_to_ptr.hbm [resolvable:$true] %s77
      %s79 = sshll.u32 [#allocation10], 4
      %s80 = int_to_ptr.vmem [resolvable:$true] %s79
      %82 = dma.hbm_to_vmem [thread:$0]  %s78, 112, %s80, [#allocation9]
    $region29: #{tpu_custom_call.1} parent=1 // pred_fallthru
      _
    // Predicated region
    $region30: #{tpu_custom_call.1} parent=1 // pred_check
      _
    $region31: #{tpu_custom_call.1} parent=1 // pred_check_branch
      %84 = sbr.rel (0) target = $region33
    $region32: #{tpu_custom_call.1} parent=1 // pred_region
      %86 = dma.done [#allocation3], 128
    $region33: #{tpu_custom_call.1} parent=1 // pred_fallthru
      _
    // Predicated region
    $region34: #{tpu_custom_call.1} parent=1 // pred_check
      _
    $region35: #{tpu_custom_call.1} parent=1 // pred_check_branch
      %88 = sbr.rel (0) target = $region37
    $region36: #{tpu_custom_call.1} parent=1 // pred_region
      %90 = dma.done [#allocation6], 128
    $region37: #{tpu_custom_call.1} parent=1 // pred_fallthru
      _
    // Predicated region
    $region38: #{tpu_custom_call.1} parent=1 // pred_check
      _
    $region39: #{tpu_custom_call.1} parent=1 // pred_check_branch
      %92 = sbr.rel (0) target = $region41
    $region40: #{tpu_custom_call.1} parent=1 // pred_region
      %94 = dma.done [#allocation6], 256
    $region41: #{tpu_custom_call.1} parent=1 // pred_fallthru
      _
    // Predicated region
    $region42: #{tpu_custom_call.1} parent=1 // pred_check
      _
    $region43: #{tpu_custom_call.1} parent=1 // pred_check_branch
      %96 = sbr.rel (0) target = $region45
    $region44: #{tpu_custom_call.1} parent=1 // pred_region
      %98 = dma.done [#allocation9], 3584
    $region45: #{tpu_custom_call.1} parent=1 // pred_fallthru
      _
    // Predicated region
    $region46: #{tpu_custom_call.1} parent=1 // pred_check
      _
    $region47: #{tpu_custom_call.1} parent=1 // pred_check_branch
      %100 = sbr.rel (0) target = $region49
    $region48: #{tpu_custom_call.1} parent=1 // pred_region
      %102 = dma.done [#allocation9], 112
    $region49: #{tpu_custom_call.1} parent=1 // pred_fallthru
      _
    %v104 = vld [vmem:[#allocation2] sm:$0xf]
    %v105 = vld [vmem:[#allocation2 + $0x4] sm:$0xf]
    %v106 = vld [vmem:[#allocation5] sm:$0xf]
    %v107 = vld [vmem:[#allocation5 + $0x4] sm:$0xf]
    %v108 = vld [vmem:[%s2] sm:$0x1]
    %v110 = vperm.slane %v108, 0
    %v114 = vunpack.c.l.b16 %v104
    %v115 = vunpack.c.l.b16 %v105
    %v116 = vpack.c.b16 %v115, %v114
    %v119 = vunpack.c.l.b16 %v106
    %v120 = vunpack.c.l.b16 %v107
    %v121 = vpack.c.b16 %v120, %v119
    %vm123 = vcmask 130048
    %v125 = vsel %vm123, %v116, 0
    %127 = vmatpush.bf16.msra.mxu0 0
    %128 = vmatpush.bf16.msra.mxu0 0
    %129 = vmatpush.bf16.msra.mxu0 0
    %130 = vmatpush.bf16.msra.mxu0 0
    %131 = vmatpush.bf16.msra.mxu0 0
    %132 = vmatpush.bf16.msra.mxu0 0
    %133 = vmatpush.bf16.msra.mxu0 0
    %134 = vmatpush.bf16.msra.mxu0 %v121
    %135 = vmatmul.bf16.gmra.mxu0 %v125
    %v136 = vpop.f32.mrf.mxu0
    %v137 = vadd.f32 %v110, %v136
    %v138 = vpop.f32.mrf.mxu0
    %v139 = vadd.f32 %v110, %v138
    %140 = vdwg.mxu0
    %v141 = vmax.f32 %v137, 0.0
    %v142 = vmax.f32 %v139, 0.0
    %v143 = vpack.c.bf16 %v142, %v141
    %v144 = vld [vmem:[#allocation7] sm:$0xf]
    %v145 = vld [vmem:[#allocation7 + $0x4] sm:$0xf]
    %v146 = vld [vmem:[#allocation7 + $0x8] sm:$0xf]
    %v147 = vld [vmem:[#allocation7 + $0xc] sm:$0xf]
    %v148 = vld [vmem:[%s4] sm:$0x1]
    %v150 = vperm.slane %v148, 0
    %v156 = vunpack.c.l.b16 %v144
    %v157 = vunpack.c.l.b16 %v145
    %v158 = vunpack.c.l.b16 %v146
    %v159 = vunpack.c.l.b16 %v147
    %v160 = vpack.c.b16 %v157, %v156
    %v161 = vpack.c.b16 %v159, %v158
    %vm164 = vcmask 261120
    %v166 = vsel %vm164, %v143, 0
    %168 = vmatpush.bf16.msra.mxu0 0
    %169 = vmatpush.bf16.msra.mxu0 0
    %170 = vmatpush.bf16.msra.mxu0 0
    %171 = vmatpush.bf16.msra.mxu0 0
    %172 = vmatpush.bf16.msra.mxu0 0
    %173 = vmatpush.bf16.msra.mxu0 0
    %174 = vmatpush.bf16.msra.mxu0 %v161
    %175 = vmatpush.bf16.msra.mxu0 %v160
    %176 = vmatmul.bf16.gmra.mxu0 %v166
    %v177 = vpop.f32.mrf.mxu0
    %v178 = vadd.f32 %v150, %v177
    %v179 = vpop.f32.mrf.mxu0
    %v180 = vadd.f32 %v150, %v179
    %181 = vdwg.mxu0
    %v182 = vmax.f32 %v178, 0.0
    %v183 = vmax.f32 %v180, 0.0
    %v184 = vpack.c.bf16 %v183, %v182
    %v185 = vld [vmem:[#allocation8] sm:$0xff]
    %v186 = vld [vmem:[#allocation8 + $0x8] sm:$0xff]
    %v187 = vld [vmem:[#allocation8 + $0x10] sm:$0xff]
    %v188 = vld [vmem:[#allocation8 + $0x18] sm:$0xf]
    %v189 = vld [vmem:[#allocation8 + $0x1c] sm:$0xff]
    %v190 = vld [vmem:[#allocation8 + $0x24] sm:$0xff]
    %v191 = vld [vmem:[#allocation8 + $0x2c] sm:$0xff]
    %v192 = vld [vmem:[#allocation8 + $0x34] sm:$0xf]
    %v193 = vld [vmem:[#allocation8 + $0x38] sm:$0xff]
    %v194 = vld [vmem:[#allocation8 + $0x40] sm:$0xff]
    %v195 = vld [vmem:[#allocation8 + $0x48] sm:$0xff]
    %v196 = vld [vmem:[#allocation8 + $0x50] sm:$0xf]
    %v197 = vld [vmem:[#allocation8 + $0x54] sm:$0xff]
    %v198 = vld [vmem:[#allocation8 + $0x5c] sm:$0xff]
    %v199 = vld [vmem:[#allocation8 + $0x64] sm:$0xff]
    %v200 = vld [vmem:[#allocation8 + $0x6c] sm:$0xf]
    %v201 = vld [vmem:[#allocation8 + $0x70] sm:$0xff]
    %v202 = vld [vmem:[#allocation8 + $0x78] sm:$0xff]
    %v203 = vld [vmem:[#allocation8 + $0x80] sm:$0xff]
    %v204 = vld [vmem:[#allocation8 + $0x88] sm:$0xf]
    %v205 = vld [vmem:[#allocation8 + $0x8c] sm:$0xff]
    %v206 = vld [vmem:[#allocation8 + $0x94] sm:$0xff]
    %v207 = vld [vmem:[#allocation8 + $0x9c] sm:$0xff]
    %v208 = vld [vmem:[#allocation8 + $0xa4] sm:$0xf]
    %v209 = vld [vmem:[#allocation8 + $0xa8] sm:$0xff]
    %v210 = vld [vmem:[#allocation8 + $0xb0] sm:$0xff]
    %v211 = vld [vmem:[#allocation8 + $0xb8] sm:$0xff]
    %v212 = vld [vmem:[#allocation8 + $0xc0] sm:$0xf]
    %v213 = vld [vmem:[#allocation8 + $0xc4] sm:$0xff]
    %v214 = vld [vmem:[#allocation8 + $0xcc] sm:$0xff]
    %v215 = vld [vmem:[#allocation8 + $0xd4] sm:$0xff]
    %v216 = vld [vmem:[#allocation8 + $0xdc] sm:$0xf]
    %v217 = vld [vmem:[#allocation10] sm:$0x7f]
    %v219 = vperm.slane %v217, 0
    %v220 = vperm.slane %v217, 1
    %v221 = vperm.slane %v217, 2
    %v222 = vperm.slane %v217, 3
    %v223 = vperm.slane %v217, 4
    %v224 = vperm.slane %v217, 5
    %v225 = vperm.slane %v217, 6
    %v265 = vunpack.c.l.b16 %v185
    %v266 = vunpack.c.h.b16 %v185
    %v267 = vunpack.c.l.b16 %v186
    %v268 = vunpack.c.h.b16 %v186
    %v269 = vunpack.c.l.b16 %v187
    %v270 = vunpack.c.h.b16 %v187
    %v271 = vunpack.c.l.b16 %v188
    %v272 = vunpack.c.l.b16 %v189
    %v273 = vunpack.c.h.b16 %v189
    %v274 = vunpack.c.l.b16 %v190
    %v275 = vunpack.c.h.b16 %v190
    %v276 = vunpack.c.l.b16 %v191
    %v277 = vunpack.c.h.b16 %v191
    %v278 = vunpack.c.l.b16 %v192
    %v279 = vunpack.c.l.b16 %v193
    %v280 = vunpack.c.h.b16 %v193
    %v281 = vunpack.c.l.b16 %v194
    %v282 = vunpack.c.h.b16 %v194
    %v283 = vunpack.c.l.b16 %v195
    %v284 = vunpack.c.h.b16 %v195
    %v285 = vunpack.c.l.b16 %v196
    %v286 = vunpack.c.l.b16 %v197
    %v287 = vunpack.c.h.b16 %v197
    %v288 = vunpack.c.l.b16 %v198
    %v289 = vunpack.c.h.b16 %v198
    %v290 = vunpack.c.l.b16 %v199
    %v291 = vunpack.c.h.b16 %v199
    %v292 = vunpack.c.l.b16 %v200
    %v293 = vunpack.c.l.b16 %v201
    %v294 = vunpack.c.h.b16 %v201
    %v295 = vunpack.c.l.b16 %v202
    %v296 = vunpack.c.h.b16 %v202
    %v297 = vunpack.c.l.b16 %v203
    %v298 = vunpack.c.h.b16 %v203
    %v299 = vunpack.c.l.b16 %v204
    %v300 = vunpack.c.l.b16 %v205
    %v301 = vunpack.c.h.b16 %v205
    %v302 = vunpack.c.l.b16 %v206
    %v303 = vunpack.c.h.b16 %v206
    %v304 = vunpack.c.l.b16 %v207
    %v305 = vunpack.c.h.b16 %v207
    %v306 = vunpack.c.l.b16 %v208
    %v307 = vunpack.c.l.b16 %v209
    %v308 = vunpack.c.h.b16 %v209
    %v309 = vunpack.c.l.b16 %v210
    %v310 = vunpack.c.h.b16 %v210
    %v311 = vunpack.c.l.b16 %v211
    %v312 = vunpack.c.h.b16 %v211
    %v313 = vunpack.c.l.b16 %v212
    %v314 = vunpack.c.l.b16 %v213
    %v315 = vunpack.c.h.b16 %v213
    %v316 = vunpack.c.l.b16 %v214
    %v317 = vunpack.c.h.b16 %v214
    %v318 = vunpack.c.l.b16 %v215
    %v319 = vunpack.c.h.b16 %v215
    %v320 = vunpack.c.l.b16 %v216
    %v321 = vpack.c.b16 %v272, %v265
    %v322 = vpack.c.b16 %v273, %v266
    %v323 = vpack.c.b16 %v274, %v267
    %v324 = vpack.c.b16 %v275, %v268
    %v325 = vpack.c.b16 %v276, %v269
    %v326 = vpack.c.b16 %v277, %v270
    %v327 = vpack.c.b16 %v278, %v271
    %v328 = vpack.c.b16 %v286, %v279
    %v329 = vpack.c.b16 %v287, %v280
    %v330 = vpack.c.b16 %v288, %v281
    %v331 = vpack.c.b16 %v289, %v282
    %v332 = vpack.c.b16 %v290, %v283
    %v333 = vpack.c.b16 %v291, %v284
    %v334 = vpack.c.b16 %v292, %v285
    %v335 = vpack.c.b16 %v300, %v293
    %v336 = vpack.c.b16 %v301, %v294
    %v337 = vpack.c.b16 %v302, %v295
    %v338 = vpack.c.b16 %v303, %v296
    %v339 = vpack.c.b16 %v304, %v297
    %v340 = vpack.c.b16 %v305, %v298
    %v341 = vpack.c.b16 %v306, %v299
    %v342 = vpack.c.b16 %v314, %v307
    %v343 = vpack.c.b16 %v315, %v308
    %v344 = vpack.c.b16 %v316, %v309
    %v345 = vpack.c.b16 %v317, %v310
    %v346 = vpack.c.b16 %v318, %v311
    %v347 = vpack.c.b16 %v319, %v312
    %v348 = vpack.c.b16 %v320, %v313
    %vm377 = vcmask 523264
    %v379 = vsel %vm377, %v184, 0
    %381 = vmatpush.bf16.msra.mxu0 0
    %382 = vmatpush.bf16.msra.mxu0 0
    %383 = vmatpush.bf16.msra.mxu0 0
    %384 = vmatpush.bf16.msra.mxu0 0
    %385 = vmatpush.bf16.msra.mxu0 %v342
    %386 = vmatpush.bf16.msra.mxu0 %v335
    %387 = vmatpush.bf16.msra.mxu0 %v328
    %388 = vmatpush.bf16.msra.mxu0 %v321
    %389 = vmatmul.bf16.gmra.mxu0 %v379
    %v390 = vpop.f32.mrf.mxu0
    %v391 = vadd.f32 %v219, %v390
    %v392 = vpop.f32.mrf.mxu0
    %v393 = vadd.f32 %v219, %v392
    %394 = vdwg.mxu0
    %395 = vmatpush.bf16.msra.mxu0 0
    %396 = vmatpush.bf16.msra.mxu0 0
    %397 = vmatpush.bf16.msra.mxu0 0
    %398 = vmatpush.bf16.msra.mxu0 0
    %399 = vmatpush.bf16.msra.mxu0 %v343
    %400 = vmatpush.bf16.msra.mxu0 %v336
    %401 = vmatpush.bf16.msra.mxu0 %v329
    %402 = vmatpush.bf16.msra.mxu0 %v322
    %403 = vmatmul.bf16.gmra.mxu0 %v379
    %v404 = vpop.f32.mrf.mxu0
    %v405 = vadd.f32 %v220, %v404
    %v406 = vpop.f32.mrf.mxu0
    %v407 = vadd.f32 %v220, %v406
    %408 = vdwg.mxu0
    %409 = vmatpush.bf16.msra.mxu0 0
    %410 = vmatpush.bf16.msra.mxu0 0
    %411 = vmatpush.bf16.msra.mxu0 0
    %412 = vmatpush.bf16.msra.mxu0 0
    %413 = vmatpush.bf16.msra.mxu0 %v344
    %414 = vmatpush.bf16.msra.mxu0 %v337
    %415 = vmatpush.bf16.msra.mxu0 %v330
    %416 = vmatpush.bf16.msra.mxu0 %v323
    %417 = vmatmul.bf16.gmra.mxu0 %v379
    %v418 = vpop.f32.mrf.mxu0
    %v419 = vadd.f32 %v221, %v418
    %v420 = vpop.f32.mrf.mxu0
    %v421 = vadd.f32 %v221, %v420
    %422 = vdwg.mxu0
    %423 = vmatpush.bf16.msra.mxu0 0
    %424 = vmatpush.bf16.msra.mxu0 0
    %425 = vmatpush.bf16.msra.mxu0 0
    %426 = vmatpush.bf16.msra.mxu0 0
    %427 = vmatpush.bf16.msra.mxu0 %v345
    %428 = vmatpush.bf16.msra.mxu0 %v338
    %429 = vmatpush.bf16.msra.mxu0 %v331
    %430 = vmatpush.bf16.msra.mxu0 %v324
    %431 = vmatmul.bf16.gmra.mxu0 %v379
    %v432 = vpop.f32.mrf.mxu0
    %v433 = vadd.f32 %v222, %v432
    %v434 = vpop.f32.mrf.mxu0
    %v435 = vadd.f32 %v222, %v434
    %436 = vdwg.mxu0
    %437 = vmatpush.bf16.msra.mxu0 0
    %438 = vmatpush.bf16.msra.mxu0 0
    %439 = vmatpush.bf16.msra.mxu0 0
    %440 = vmatpush.bf16.msra.mxu0 0
    %441 = vmatpush.bf16.msra.mxu0 %v346
    %442 = vmatpush.bf16.msra.mxu0 %v339
    %443 = vmatpush.bf16.msra.mxu0 %v332
    %444 = vmatpush.bf16.msra.mxu0 %v325
    %445 = vmatmul.bf16.gmra.mxu0 %v379
    %v446 = vpop.f32.mrf.mxu0
    %v447 = vadd.f32 %v223, %v446
    %v448 = vpop.f32.mrf.mxu0
    %v449 = vadd.f32 %v223, %v448
    %450 = vdwg.mxu0
    %451 = vmatpush.bf16.msra.mxu0 0
    %452 = vmatpush.bf16.msra.mxu0 0
    %453 = vmatpush.bf16.msra.mxu0 0
    %454 = vmatpush.bf16.msra.mxu0 0
    %455 = vmatpush.bf16.msra.mxu0 %v347
    %456 = vmatpush.bf16.msra.mxu0 %v340
    %457 = vmatpush.bf16.msra.mxu0 %v333
    %458 = vmatpush.bf16.msra.mxu0 %v326
    %459 = vmatmul.bf16.gmra.mxu0 %v379
    %v460 = vpop.f32.mrf.mxu0
    %v461 = vadd.f32 %v224, %v460
    %v462 = vpop.f32.mrf.mxu0
    %v463 = vadd.f32 %v224, %v462
    %464 = vdwg.mxu0
    %465 = vmatpush.bf16.msra.mxu0 0
    %466 = vmatpush.bf16.msra.mxu0 0
    %467 = vmatpush.bf16.msra.mxu0 0
    %468 = vmatpush.bf16.msra.mxu0 0
    %469 = vmatpush.bf16.msra.mxu0 %v348
    %470 = vmatpush.bf16.msra.mxu0 %v341
    %471 = vmatpush.bf16.msra.mxu0 %v334
    %472 = vmatpush.bf16.msra.mxu0 %v327
    %473 = vmatmul.bf16.gmra.mxu0 %v379
    %v474 = vpop.f32.mrf.mxu0
    %v475 = vadd.f32 %v225, %v474
    %v476 = vpop.f32.mrf.mxu0
    %v477 = vadd.f32 %v225, %v476
    %478 = vdwg.mxu0
    %v479 = vsub.f32 0.0, %v391
    %v480 = vsub.f32 0.0, %v405
    %v481 = vsub.f32 0.0, %v419
    %v482 = vsub.f32 0.0, %v433
    %v483 = vsub.f32 0.0, %v447
    %v484 = vsub.f32 0.0, %v461
    %v485 = vsub.f32 0.0, %v475
    %v486 = vsub.f32 0.0, %v393
    %v487 = vsub.f32 0.0, %v407
    %v488 = vsub.f32 0.0, %v421
    %v489 = vsub.f32 0.0, %v435
    %v490 = vsub.f32 0.0, %v449
    %v491 = vsub.f32 0.0, %v463
    %v492 = vsub.f32 0.0, %v477
    %v493 = vmul.f32 %v479, 1.442695
    %v494 = vpow.pop %v493
    %v495 = vmul.f32 %v480, 1.442695
    %v496 = vpow.pop %v495
    %v497 = vmul.f32 %v481, 1.442695
    %v498 = vpow.pop %v497
    %v499 = vmul.f32 %v482, 1.442695
    %v500 = vpow.pop %v499
    %v501 = vmul.f32 %v483, 1.442695
    %v502 = vpow.pop %v501
    %v503 = vmul.f32 %v484, 1.442695
    %v504 = vpow.pop %v503
    %v505 = vmul.f32 %v485, 1.442695
    %v506 = vpow.pop %v505
    %v507 = vmul.f32 %v486, 1.442695
    %v508 = vpow.pop %v507
    %v509 = vmul.f32 %v487, 1.442695
    %v510 = vpow.pop %v509
    %v511 = vmul.f32 %v488, 1.442695
    %v512 = vpow.pop %v511
    %v513 = vmul.f32 %v489, 1.442695
    %v514 = vpow.pop %v513
    %v515 = vmul.f32 %v490, 1.442695
    %v516 = vpow.pop %v515
    %v517 = vmul.f32 %v491, 1.442695
    %v518 = vpow.pop %v517
    %v519 = vmul.f32 %v492, 1.442695
    %v520 = vpow.pop %v519
    %v521 = vadd.f32 %v494, 1.0
    %v522 = vadd.f32 %v496, 1.0
    %v523 = vadd.f32 %v498, 1.0
    %v524 = vadd.f32 %v500, 1.0
    %v525 = vadd.f32 %v502, 1.0
    %v526 = vadd.f32 %v504, 1.0
    %v527 = vadd.f32 %v506, 1.0
    %v528 = vadd.f32 %v508, 1.0
    %v529 = vadd.f32 %v510, 1.0
    %v530 = vadd.f32 %v512, 1.0
    %v531 = vadd.f32 %v514, 1.0
    %v532 = vadd.f32 %v516, 1.0
    %v533 = vadd.f32 %v518, 1.0
    %v534 = vadd.f32 %v520, 1.0
    %v535 = vrcp.pop %v521
    %v536 = vrcp.pop %v522
    %v537 = vrcp.pop %v523
    %v538 = vrcp.pop %v524
    %v539 = vrcp.pop %v525
    %v540 = vrcp.pop %v526
    %v541 = vrcp.pop %v527
    %v542 = vrcp.pop %v528
    %v543 = vrcp.pop %v529
    %v544 = vrcp.pop %v530
    %v545 = vrcp.pop %v531
    %v546 = vrcp.pop %v532
    %v547 = vrcp.pop %v533
    %v548 = vrcp.pop %v534
    %v549 = vpack.c.bf16 %v536, %v535
    %v550 = vpack.c.bf16 %v538, %v537
    %v551 = vpack.c.bf16 %v540, %v539
    %v552 = vpack.c.bf16 %v541, %v541
    %v553 = vpack.c.bf16 %v543, %v542
    %v554 = vpack.c.bf16 %v545, %v544
    %v555 = vpack.c.bf16 %v547, %v546
    %v556 = vpack.c.bf16 %v548, %v548
    %557 = vst [vmem:[#allocation11] sm:$0xff] %v549
    %558 = vst [vmem:[#allocation11 + $0x8] sm:$0xff] %v550
    %559 = vst [vmem:[#allocation11 + $0x10] sm:$0xff] %v551
    %vm560 = vcmask 125952
    %561 = vst.msk [vmem:[#allocation11 + $0x18] sm:$0xf] %vm560, %v552
    %562 = vst [vmem:[#allocation11 + $0x1c] sm:$0xff] %v553
    %563 = vst [vmem:[#allocation11 + $0x24] sm:$0xff] %v554
    %564 = vst [vmem:[#allocation11 + $0x2c] sm:$0xff] %v555
    %565 = vst.msk [vmem:[#allocation11 + $0x34] sm:$0xf] %vm560, %v556
    // Predicated region
    $region50: #{tpu_custom_call.1} parent=1 // pred_check
      _
    $region51: #{tpu_custom_call.1} parent=1 // pred_check_branch
      %567 = sbr.rel (0) target = $region53
    $region52: #{tpu_custom_call.1} parent=1 // pred_region
      %569 = vsyncadd [#allocation4], 0
      %s570 = sshll.u32 [#allocation11], 4
      %s571 = int_to_ptr.vmem [resolvable:$true] %s570
      %s572 = sshll.u32 %s7, 4
      %s573 = int_to_ptr.hbm [resolvable:$true] %s572
      %578 = dma.vmem_to_hbm [thread:$0]  %s571, 896, %s573, [#allocation4], 448, 448, 28
    $region53: #{tpu_custom_call.1} parent=1 // pred_fallthru
      _
    // Predicated region
    $region54: #{tpu_custom_call.1} parent=1 // pred_check
      _
    $region55: #{tpu_custom_call.1} parent=1 // pred_check_branch
      %580 = sbr.rel (0) target = $region57
    $region56: #{tpu_custom_call.1} parent=1 // pred_region
      %582 = dma.done [#allocation4], 896
    $region57: #{tpu_custom_call.1} parent=1 // pred_fallthru
      _
    %583 = vsyncpa [#allocation3], 1
    %584 = vsyncpa [#allocation6], 1
    %585 = vsyncpa [#allocation9], 1
    %586 = vsyncpa [#allocation4], 1

</llo_original>
